<compile_context>
chip_gen: v5e
topology: v5e:2x2
jax: 0.10.0
libtpu: 0.0.40
codegen_flags: <defaults>
</compile_context>

<pallas_src>
import functools

import jax
import jax.numpy as jnp
from jax import lax
from jax.experimental import pallas as pl
from jax.experimental.pallas import tpu as pltpu


# ----------------------------------------------------------------------------
# small static helpers
# ----------------------------------------------------------------------------
def _cdiv(a, b):
    return -(-a // b)


def _round_up(a, m):
    return _cdiv(a, m) * m


def _conv_out_dim(d, k, s, p):
    return (d + 2 * p - k) // s + 1


# ----------------------------------------------------------------------------
# Generic tiled bf16 matmul kernel (used for conv1 im2col and 1x1x1 downsamples)
# ----------------------------------------------------------------------------
def _mm_kernel(a_ref, b_ref, o_ref, acc_ref):
    @pl.when(pl.program_id(2) == 0)
    def _():
        acc_ref[...] = jnp.zeros_like(acc_ref)

    acc_ref[...] += jnp.dot(a_ref[...], b_ref[...],
                            preferred_element_type=jnp.float32)

    @pl.when(pl.program_id(2) == pl.num_programs(2) - 1)
    def _():
        o_ref[...] = acc_ref[...]


def pallas_matmul(a, b):
    """a: (M, K), b: (K, N) -> (M, N) f32.  bf16 MXU inputs, f32 accumulation."""
    a = a.astype(jnp.bfloat16)
    b = b.astype(jnp.bfloat16)
    M, K = a.shape
    K2, N = b.shape
    assert K == K2

    mt = _cdiv(M, 256)
    tm = _round_up(_cdiv(M, mt), 8)
    Mp = mt * tm

    if N % 128 == 0:
        nt = _cdiv(N, 256)
        tn = _round_up(_cdiv(N, nt), 128)
        Np = nt * tn
    else:
        nt, tn, Np = 1, N, N

    if K <= 128:
        Kp, tk, kt = K, K, 1
    elif K <= 1024:
        Kp = _round_up(K, 128)
        tk, kt = Kp, 1
    else:
        tk = 512
        Kp = _round_up(K, tk)
        kt = Kp // tk

    a = jnp.pad(a, ((0, Mp - M), (0, Kp - K)))
    b = jnp.pad(b, ((0, Kp - K), (0, Np - N)))

    out = pl.pallas_call(
        _mm_kernel,
        out_shape=jax.ShapeDtypeStruct((Mp, Np), jnp.float32),
        grid_spec=pltpu.PrefetchScalarGridSpec(
            num_scalar_prefetch=0,
            grid=(mt, nt, kt),
            in_specs=[pl.BlockSpec((tm, tk), lambda i, j, k: (i, k)),
                      pl.BlockSpec((tk, tn), lambda i, j, k: (k, j))],
            out_specs=pl.BlockSpec((tm, tn), lambda i, j, k: (i, j)),
            scratch_shapes=[pltpu.VMEM((tm, tn), jnp.float32)]),
        compiler_params=pltpu.CompilerParams(
            dimension_semantics=("parallel", "parallel", "arbitrary")),
        cost_estimate=pl.CostEstimate(
            flops=2 * Mp * Kp * Np, transcendentals=0,
            bytes_accessed=(Mp * Kp + Kp * Np) * 2 + Mp * Np * 4),
    )(a, b)
    return out[:M, :N]


# ----------------------------------------------------------------------------
# "run" representation: padded NDHWC activation -> flat (rows, C) buffer such
# that every conv/pool tap is a contiguous row slice at a static offset.
# ----------------------------------------------------------------------------
def _build_run_input(x, k, s, p, pad_value=0.0):
    """x: (N, D, H, W, C).  Returns (xflat (rows, C), starts [k^3 ints], geom)."""
    N, D, H, W, C = x.shape
    Do, Ho, Wo = (_conv_out_dim(d, k, s, p) for d in (D, H, W))
    if p > 0:
        xp = jnp.pad(x, ((0, 0), (p, p), (p, p), (p, p), (0, 0)),
                     constant_values=pad_value)
    else:
        xp = x
    q = (k - 1) // s
    Dq, Hq, Wq = q + Do, q + Ho, q + Wo

    if s == 1:
        phases = xp[:, :Dq, :Hq, :Wq, :][None]
    else:
        plist = []
        for a in range(s):
            for b in range(s):
                for c in range(s):
                    sub = xp[:, a::s, b::s, c::s, :][:, :Dq, :Hq, :Wq, :]
                    sub = jnp.pad(
                        sub,
                        ((0, 0),
                         (0, Dq - sub.shape[1]),
                         (0, Hq - sub.shape[2]),
                         (0, Wq - sub.shape[3]),
                         (0, 0)),
                        constant_values=pad_value)
                    plist.append(sub)
        phases = jnp.stack(plist, axis=0)

    P = phases.shape[0]
    Lph = Dq * Hq * Wq
    xflat = phases.reshape(P * N * Lph, C)

    starts = []
    for i in range(k):
        for j in range(k):
            for kk in range(k):
                plin = ((i % s) * s + (j % s)) * s + (kk % s)
                starts.append(plin * N * Lph
                              + (i // s) * Hq * Wq + (j // s) * Wq + (kk // s))

    Mrun = (N - 1) * Lph + (Do - 1) * Hq * Wq + (Ho - 1) * Wq + Wo
    geom = (N, Do, Ho, Wo, Dq, Hq, Wq, Lph, Mrun)
    return xflat, starts, geom


def _extract_run_output(orun, geom, Cout):
    """Discard wrap-around garbage rows of the run output and reshape to NDHWC."""
    N, Do, Ho, Wo, Dq, Hq, Wq, Lph, Mrun = geom
    need = N * Lph
    rows = orun.shape[0]
    if rows < need:
        orun = jnp.pad(orun, ((0, need - rows), (0, 0)))
    elif rows > need:
        orun = orun[:need]
    o = orun[:, :Cout].reshape(N, Dq, Hq, Wq, Cout)
    return o[:, :Do, :Ho, :Wo, :]


# ----------------------------------------------------------------------------
# Conv3d as tap accumulation (k^3 taps on the reduction grid axis)
# ----------------------------------------------------------------------------
def _conv_taps_kernel(starts_ref, x_ref, w_ref, o_ref, acc_ref, *, tm):
    t = pl.program_id(2)

    @pl.when(t == 0)
    def _():
        acc_ref[...] = jnp.zeros_like(acc_ref)

    row0 = pl.program_id(0) * tm + starts_ref[t]
    a = x_ref[pl.ds(row0, tm), :].astype(jnp.bfloat16)
    acc_ref[...] += jnp.dot(a, w_ref[0], preferred_element_type=jnp.float32)

    @pl.when(t == pl.num_programs(2) - 1)
    def _():
        o_ref[...] = acc_ref[...]


def conv3d_taps(x, w, *, stride, padding):
    """x: (N,D,H,W,Cin) f32, w: (Cout,Cin,k,k,k) torch layout -> (N,Do,Ho,Wo,Cout) f32."""
    Cout, Cin, kd, kh, kw = w.shape
    assert kd == kh == kw and Cin == x.shape[-1]
    k, s, p = kd, stride, padding

    xflat, starts, geom = _build_run_input(x, k, s, p, pad_value=0.0)
    Mrun = geom[-1]
    T = k ** 3

    wt = jnp.transpose(w, (2, 3, 4, 1, 0)).reshape(T, Cin, Cout).astype(jnp.bfloat16)

    # per-layer tile selection
    mt = _cdiv(Mrun, 256)
    tm = _round_up(_cdiv(Mrun, mt), 8)
    Mp = mt * tm
    if Cout % 128 == 0:
        nt = _cdiv(Cout, 256)
        tn = Cout // nt
    else:
        nt, tn = 1, Cout

    max_start = max(starts)
    rows_needed = Mp + max_start
    if rows_needed > xflat.shape[0]:
        xflat = jnp.pad(xflat, ((0, rows_needed - xflat.shape[0]), (0, 0)))
    rows = xflat.shape[0]
    starts_arr = jnp.asarray(starts, dtype=jnp.int32)

    kern = functools.partial(_conv_taps_kernel, tm=tm)
    out = pl.pallas_call(
        kern,
        out_shape=jax.ShapeDtypeStruct((Mp, Cout), jnp.float32),
        grid_spec=pltpu.PrefetchScalarGridSpec(
            num_scalar_prefetch=1,
            grid=(mt, nt, T),
            in_specs=[pl.BlockSpec((rows, Cin), lambda i, j, t, st: (0, 0)),
                      pl.BlockSpec((1, Cin, tn), lambda i, j, t, st: (t, 0, j))],
            out_specs=pl.BlockSpec((tm, tn), lambda i, j, t, st: (i, j)),
            scratch_shapes=[pltpu.VMEM((tm, tn), jnp.float32)]),
        compiler_params=pltpu.CompilerParams(
            dimension_semantics=("parallel", "parallel", "arbitrary")),
        cost_estimate=pl.CostEstimate(
            flops=2 * Mp * Cin * Cout * T, transcendentals=0,
            bytes_accessed=rows * Cin * 4 + T * Cin * Cout * 2 + Mp * Cout * 4),
    )(starts_arr, xflat, wt)

    return _extract_run_output(out, geom, Cout)


# ----------------------------------------------------------------------------
# conv1 (7x7x7, Cin=1): im2col + tiled matmul (per-tap K would be 1)
# ----------------------------------------------------------------------------
def conv3d_im2col(x, w, *, stride, padding):
    N, D, H, W, C = x.shape
    Cout, Cin, kd, kh, kw = w.shape
    s, p = stride, padding
    Do, Ho, Wo = (_conv_out_dim(d, kd, s, p) for d in (D, H, W))
    xp = jnp.pad(x, ((0, 0), (p, p), (p, p), (p, p), (0, 0)))
    taps = []
    for i in range(kd):
        for j in range(kh):
            for k in range(kw):
                taps.append(xp[:,
                               i: i + s * (Do - 1) + 1: s,
                               j: j + s * (Ho - 1) + 1: s,
                               k: k + s * (Wo - 1) + 1: s, :])
    a = jnp.stack(taps, axis=-2).reshape(N * Do * Ho * Wo, kd * kh * kw * Cin)
    bmat = jnp.transpose(w, (2, 3, 4, 1, 0)).reshape(kd * kh * kw * Cin, Cout)
    out = pallas_matmul(a, bmat)
    return out.reshape(N, Do, Ho, Wo, Cout)


# ----------------------------------------------------------------------------
# 1x1x1 (strided) downsample conv
# ----------------------------------------------------------------------------
def conv1x1x1_strided(x, w, *, stride):
    Cout, Cin = w.shape[0], w.shape[1]
    xs = x[:, ::stride, ::stride, ::stride, :]
    N, Do, Ho, Wo, _ = xs.shape
    out = pallas_matmul(xs.reshape(-1, Cin), w.reshape(Cout, Cin).T)
    return out.reshape(N, Do, Ho, Wo, Cout)


# ----------------------------------------------------------------------------
# MaxPool3d as tap accumulation with a running max
# ----------------------------------------------------------------------------
def _max_taps_kernel(starts_ref, x_ref, o_ref, *, tm):
    t = pl.program_id(1)
    row0 = pl.program_id(0) * tm + starts_ref[t]
    v = x_ref[pl.ds(row0, tm), :]

    @pl.when(t == 0)
    def _():
        o_ref[...] = v

    @pl.when(t > 0)
    def _():
        o_ref[...] = jnp.maximum(o_ref[...], v)


def maxpool3d(x, *, ksize=3, stride=2, padding=1):
    N, D, H, W, C = x.shape
    xflat, starts, geom = _build_run_input(x, ksize, stride, padding,
                                           pad_value=float("-inf"))
    Mrun = geom[-1]
    T = ksize ** 3

    mt = _cdiv(Mrun, 512)
    tm = _round_up(_cdiv(Mrun, mt), 8)
    Mp = mt * tm

    max_start = max(starts)
    rows_needed = Mp + max_start
    if rows_needed > xflat.shape[0]:
        xflat = jnp.pad(xflat, ((0, rows_needed - xflat.shape[0]), (0, 0)))
    rows = xflat.shape[0]
    starts_arr = jnp.asarray(starts, dtype=jnp.int32)

    kern = functools.partial(_max_taps_kernel, tm=tm)
    out = pl.pallas_call(
        kern,
        out_shape=jax.ShapeDtypeStruct((Mp, C), jnp.float32),
        grid_spec=pltpu.PrefetchScalarGridSpec(
            num_scalar_prefetch=1,
            grid=(mt, T),
            in_specs=[pl.BlockSpec((rows, C), lambda i, t, st: (0, 0))],
            out_specs=pl.BlockSpec((tm, C), lambda i, t, st: (i, 0))),
        compiler_params=pltpu.CompilerParams(
            dimension_semantics=("parallel", "arbitrary")),
    )(starts_arr, xflat)

    return _extract_run_output(out, geom, C)


# ----------------------------------------------------------------------------
# BatchNorm (training-mode batch stats): tiled two-pass + fused residual/ReLU
# ----------------------------------------------------------------------------
def _bn_stats_kernel(x_ref, s_ref, q_ref):
    @pl.when(pl.program_id(0) == 0)
    def _():
        s_ref[...] = jnp.zeros_like(s_ref)
        q_ref[...] = jnp.zeros_like(q_ref)

    x = x_ref[...]
    s_ref[...] += jnp.sum(x, axis=0, keepdims=True)
    q_ref[...] += jnp.sum(x * x, axis=0, keepdims=True)


def _bn_apply_kernel(x_ref, a_ref, b_ref, o_ref, *, relu):
    y = x_ref[...] * a_ref[...] + b_ref[...]
    if relu:
        y = jnp.maximum(y, 0.0)
    o_ref[...] = y


def _bn_apply_res_kernel(x_ref, r_ref, a_ref, b_ref, o_ref):
    y = x_ref[...] * a_ref[...] + b_ref[...] + r_ref[...]
    o_ref[...] = jnp.maximum(y, 0.0)


def _tiled_rows(M, cap):
    if M <= cap:
        return 1, M
    mt = _cdiv(M, cap)
    tm = _round_up(_cdiv(M, mt), 8)
    return mt, tm


def batchnorm(x, gamma, beta, *, eps=1e-5, relu=False, residual=None):
    """x: (N,D,H,W,C) f32.  Normalizes over N*D*H*W per channel (torch training BN)."""
    shp = x.shape
    C = shp[-1]
    M = x.size // C
    x2 = x.reshape(M, C)

    # ---- pass 1: per-channel sum / sumsq, tiled over M, accumulated in-kernel ----
    mt, tm = _tiled_rows(M, 512)
    Mp = mt * tm
    xs = jnp.pad(x2, ((0, Mp - M), (0, 0))) if Mp > M else x2
    ssum, ssq = pl.pallas_call(
        _bn_stats_kernel,
        out_shape=(jax.ShapeDtypeStruct((1, C), jnp.float32),
                   jax.ShapeDtypeStruct((1, C), jnp.float32)),
        grid_spec=pltpu.PrefetchScalarGridSpec(
            num_scalar_prefetch=0,
            grid=(mt,),
            in_specs=[pl.BlockSpec((tm, C), lambda i: (i, 0))],
            out_specs=(pl.BlockSpec((1, C), lambda i: (0, 0)),
                       pl.BlockSpec((1, C), lambda i: (0, 0)))),
        compiler_params=pltpu.CompilerParams(
            dimension_semantics=("arbitrary",)),
    )(xs)

    mean = ssum / M
    var = jnp.maximum(ssq / M - mean * mean, 0.0)       # biased variance (torch training BN)
    scale = gamma.reshape(1, C).astype(jnp.float32) * lax.rsqrt(var + eps)
    shift = beta.reshape(1, C).astype(jnp.float32) - mean * scale

    # ---- pass 2: normalize (+ residual) (+ ReLU), lane-dense folding for C < 128 ----
    fold = 1
    if C < 128 and 128 % C == 0 and M % (128 // C) == 0:
        fold = 128 // C
    Mf, Cf = M // fold, C * fold
    xf = x2.reshape(Mf, Cf)
    scale_f = jnp.tile(scale, (1, fold))
    shift_f = jnp.tile(shift, (1, fold))

    mt2, tm2 = _tiled_rows(Mf, 256)
    Mfp = mt2 * tm2
    if Mfp > Mf:
        xf = jnp.pad(xf, ((0, Mfp - Mf), (0, 0)))

    args = [xf]
    if residual is not None:
        rf = residual.reshape(Mf, Cf)
        if Mfp > Mf:
            rf = jnp.pad(rf, ((0, Mfp - Mf), (0, 0)))
        args.append(rf)
    args += [scale_f, shift_f]

    in_specs = ([pl.BlockSpec((tm2, Cf), lambda i: (i, 0))] * (len(args) - 2)
                + [pl.BlockSpec((1, Cf), lambda i: (0, 0))] * 2)
    kern = (_bn_apply_res_kernel if residual is not None
            else functools.partial(_bn_apply_kernel, relu=relu))

    y = pl.pallas_call(
        kern,
        out_shape=jax.ShapeDtypeStruct((Mfp, Cf), jnp.float32),
        grid_spec=pltpu.PrefetchScalarGridSpec(
            num_scalar_prefetch=0,
            grid=(mt2,),
            in_specs=in_specs,
            out_specs=pl.BlockSpec((tm2, Cf), lambda i: (i, 0))),
        compiler_params=pltpu.CompilerParams(
            dimension_semantics=("parallel",)),
    )(*args)

    if Mfp > Mf:
        y = y[:Mf]
    return y.reshape(shp)


# ----------------------------------------------------------------------------
# Fused global average pool + FC
# ----------------------------------------------------------------------------
def _pool_fc_kernel(x_ref, w_ref, b_ref, o_ref):
    pooled = jnp.mean(x_ref[...], axis=1)
    o_ref[...] = (jnp.dot(pooled, w_ref[...],
                          preferred_element_type=jnp.float32) + b_ref[...])


# ----------------------------------------------------------------------------
# BasicBlock3D
# ----------------------------------------------------------------------------
def basic_block(x, bp):
    s = bp["stride"]
    out = conv3d_taps(x, bp["conv1_w"], stride=s, padding=1)
    out = batchnorm(out, bp["bn1_g"], bp["bn1_b"], relu=True)
    out = conv3d_taps(out, bp["conv2_w"], stride=1, padding=1)

    if "ds_conv_w" in bp:
        idy = conv1x1x1_strided(x, bp["ds_conv_w"], stride=s)
        idy = batchnorm(idy, bp["ds_bn_g"], bp["ds_bn_b"], relu=False)
    else:
        idy = x

    return batchnorm(out, bp["bn2_g"], bp["bn2_b"], residual=idy)


# ----------------------------------------------------------------------------
# Parameter init (deterministic; mirrors torch kaiming_normal fan_out for conv,
# ones/zeros for BN, uniform(+-1/sqrt(fan_in)) for the FC).
# ----------------------------------------------------------------------------
def _kaiming_conv(key, cout, cin, k):
    fan_out = cout * k * k * k
    std = (2.0 / fan_out) ** 0.5
    return jax.random.normal(key, (cout, cin, k, k, k), jnp.float32) * std


def init_resnet18_3d_params(key, in_channels=1, num_classes=2):
    kit = iter(jax.random.split(key, 64))
    params = {}
    params["conv1_w"] = _kaiming_conv(next(kit), 64, in_channels, 7)
    params["bn1_g"] = jnp.ones((64,), jnp.float32)
    params["bn1_b"] = jnp.zeros((64,), jnp.float32)

    layer_cfg = [(64, 2, 1), (128, 2, 2), (256, 2, 2), (512, 2, 2)]
    inplanes = 64
    layers = []
    for planes, nblocks, stride in layer_cfg:
        blocks = []
        for bi in range(nblocks):
            s = stride if bi == 0 else 1
            bp = {
                "stride": s,
                "conv1_w": _kaiming_conv(next(kit), planes, inplanes, 3),
                "bn1_g": jnp.ones((planes,), jnp.float32),
                "bn1_b": jnp.zeros((planes,), jnp.float32),
                "conv2_w": _kaiming_conv(next(kit), planes, planes, 3),
                "bn2_g": jnp.ones((planes,), jnp.float32),
                "bn2_b": jnp.zeros((planes,), jnp.float32),
            }
            if s != 1 or inplanes != planes:
                bp["ds_conv_w"] = _kaiming_conv(next(kit), planes, inplanes, 1)
                bp["ds_bn_g"] = jnp.ones((planes,), jnp.float32)
                bp["ds_bn_b"] = jnp.zeros((planes,), jnp.float32)
            blocks.append(bp)
            inplanes = planes
        layers.append(blocks)
    params["layers"] = layers

    fan_in = 512
    bound = 1.0 / (fan_in ** 0.5)
    params["fc_w"] = jax.random.uniform(next(kit), (512, num_classes),
                                        jnp.float32, -bound, bound)
    params["fc_b"] = jax.random.uniform(next(kit), (num_classes,),
                                        jnp.float32, -bound, bound)
    return params


# ----------------------------------------------------------------------------
# Full forward (input in PyTorch NCDHW layout)
# ----------------------------------------------------------------------------
def resnet3d_forward(params, x_ncdhw):
    x = jnp.transpose(x_ncdhw, (0, 2, 3, 4, 1)).astype(jnp.float32)  # -> NDHWC

    x = conv3d_im2col(x, params["conv1_w"], stride=2, padding=3)
    x = batchnorm(x, params["bn1_g"], params["bn1_b"], relu=True)
    x = maxpool3d(x, ksize=3, stride=2, padding=1)

    for blocks in params["layers"]:
        for bp in blocks:
            x = basic_block(x, bp)

    # Dropout(p=0.0) is an exact identity -> omitted.
    N, C = x.shape[0], x.shape[-1]
    x3 = x.reshape(N, -1, C)
    num_classes = params["fc_w"].shape[1]
    logits = pl.pallas_call(
        _pool_fc_kernel,
        out_shape=jax.ShapeDtypeStruct((N, num_classes), jnp.float32),
    )(x3, params["fc_w"], params["fc_b"].reshape(1, -1))
    return logits


if __name__ == "__main__":
    key = jax.random.PRNGKey(0)
    pkey, xkey = jax.random.split(key)
    params = init_resnet18_3d_params(pkey, in_channels=1, num_classes=2)

    # Small input consistent with the module: (batch=2, in_channels=1, D=H=W=16), NCDHW.
    x = jax.random.normal(xkey, (2, 1, 16, 16, 16), jnp.float32)

    logits = resnet3d_forward(params, x)
    logits = jax.block_until_ready(logits)

    assert logits.shape == (2, 2)
    assert bool(jnp.all(jnp.isfinite(logits)))
    print("KERNEL_OK")
</pallas_src>

<mosaic_0001>
module attributes {stable_mosaic.version = 11 : i64} {
  func.func @_mm_kernel(%arg0: i32, %arg1: i32, %arg2: i32, %arg3: memref<256x384xbf16, #tpu.memory_space<vmem>>, %arg4: memref<384x64xbf16, #tpu.memory_space<vmem>>, %arg5: memref<256x64xf32, #tpu.memory_space<vmem>>, %arg6: memref<256x64xf32, #tpu.memory_space<vmem>>) attributes {dimension_semantics = [#tpu.dimension_semantics<parallel>, #tpu.dimension_semantics<parallel>, #tpu.dimension_semantics<arbitrary>], iteration_bounds = array<i64: 4, 1, 1>, scalar_prefetch = 0 : i64, scratch_operands = 1 : i64, tpu.core_type = #tpu.core_type<tc>, window_params = [{transform_indices = @transform_0, window_bounds = array<i64: 256, 384>}, {transform_indices = @transform_1, window_bounds = array<i64: 384, 64>}, {transform_indices = @transform_2, window_bounds = array<i64: 256, 64>}]} {
    %c0_i32 = arith.constant 0 : i32
    %0 = arith.cmpi eq, %arg2, %c0_i32 : i32
    %1 = arith.extui %0 : i1 to i32
    %c0_i32_0 = arith.constant 0 : i32
    %2 = arith.cmpi ne, %1, %c0_i32_0 : i32
    scf.if %2 {
      %cst_10 = arith.constant 0.000000e+00 : f32
      %12 = vector.broadcast %cst_10 : f32 to vector<256x64xf32>
      %c0_11 = arith.constant 0 : index
      %c0_12 = arith.constant 0 : index
      %13 = vector.load %arg6[%c0_11, %c0_12] : memref<256x64xf32, #tpu.memory_space<vmem>>, vector<256x64xf32>
      tpu.vector_store %arg6[%c0_11, %c0_12], %12 {strides = array<i32>} : memref<256x64xf32, #tpu.memory_space<vmem>>, vector<256x64xf32>,
    } else {
    }
    %c0 = arith.constant 0 : index
    %c0_1 = arith.constant 0 : index
    %3 = vector.load %arg6[%c0, %c0_1] : memref<256x64xf32, #tpu.memory_space<vmem>>, vector<256x64xf32>
    %c0_2 = arith.constant 0 : index
    %c0_3 = arith.constant 0 : index
    %4 = vector.load %arg3[%c0_2, %c0_3] : memref<256x384xbf16, #tpu.memory_space<vmem>>, vector<256x384xbf16>
    %c0_4 = arith.constant 0 : index
    %c0_5 = arith.constant 0 : index
    %5 = vector.load %arg4[%c0_4, %c0_5] : memref<384x64xbf16, #tpu.memory_space<vmem>>, vector<384x64xbf16>
    %cst = arith.constant dense<0.000000e+00> : vector<256x64xf32>
    %6 = tpu.matmul %4, %5, %cst {dimension_numbers = #tpu.dot_dimension_numbers<[1], [0], [0], [1], [0, 0, 1, 1], [], []>} : vector<256x384xbf16>, vector<384x64xbf16>, vector<256x64xf32> -> vector<256x64xf32>
    %7 = arith.addf %3, %6 : vector<256x64xf32>
    %c0_6 = arith.constant 0 : index
    %c0_7 = arith.constant 0 : index
    %8 = vector.load %arg6[%c0_6, %c0_7] : memref<256x64xf32, #tpu.memory_space<vmem>>, vector<256x64xf32>
    tpu.vector_store %arg6[%c0_6, %c0_7], %7 {strides = array<i32>} : memref<256x64xf32, #tpu.memory_space<vmem>>, vector<256x64xf32>,
    %c0_i32_8 = arith.constant 0 : i32
    %9 = arith.cmpi eq, %arg2, %c0_i32_8 : i32
    %10 = arith.extui %9 : i1 to i32
    %c0_i32_9 = arith.constant 0 : i32
    %11 = arith.cmpi ne, %10, %c0_i32_9 : i32
    scf.if %11 {
      %c0_10 = arith.constant 0 : index
      %c0_11 = arith.constant 0 : index
      %12 = vector.load %arg6[%c0_10, %c0_11] : memref<256x64xf32, #tpu.memory_space<vmem>>, vector<256x64xf32>
      %c0_12 = arith.constant 0 : index
      %c0_13 = arith.constant 0 : index
      %13 = vector.load %arg5[%c0_12, %c0_13] : memref<256x64xf32, #tpu.memory_space<vmem>>, vector<256x64xf32>
      tpu.vector_store %arg5[%c0_12, %c0_13], %12 {strides = array<i32>} : memref<256x64xf32, #tpu.memory_space<vmem>>, vector<256x64xf32>,
    } else {
    }
    return
  }
  func.func @transform_0(%arg0: i32, %arg1: i32, %arg2: i32) -> (i32, i32) {
    %c0_i32 = arith.constant 0 : i32
    return %arg0, %arg2 : i32, i32
  }
  func.func @transform_1(%arg0: i32, %arg1: i32, %arg2: i32) -> (i32, i32) {
    %c0_i32 = arith.constant 0 : i32
    return %arg2, %arg1 : i32, i32
  }
  func.func @transform_2(%arg0: i32, %arg1: i32, %arg2: i32) -> (i32, i32) {
    %c0_i32 = arith.constant 0 : i32
    return %arg0, %arg1 : i32, i32
  }
}

</mosaic_0001>

<llo_original>
// kernel: tpu_custom_call.1
$region0: #{tpu_custom_call.1}
  #allocation0 [shape = 'u32[]', space=smem, size = 0x4, offset = 0x4, fixed_abs, tag = 'smem constant byte address 0x4 - core index']
  #allocation1 [shape = 'u32[72,128]{1,0:T(1,128)}', space=vmem, size = 0x9000, scoped, tag = 'internal scratch']
  #allocation2 [shape = 'f32[256,64]{1,0:T(8,128)}', space=vmem, size = 0x20000, scoped, tag = 'scratch operand']
  %s0 = inlined_call_operand.hbm [shape: bf16[1024,384], index: 0, kind: input, shape index: {}]
  %s1 = inlined_call_operand.vmem [shape: bf16[384,64], index: 1, kind: input, shape index: {}]
  %s2 = inlined_call_operand.vmem [shape: f32[1024,64], index: 2, kind: output, shape index: {}]
  %s3 = sld [smem:[#allocation0]]
  $region53: #{tpu_custom_call.1} parent=0
    _
  %s5 = ssub.s32 1, %s3
  %s6 = scalar_select 0, %s5, %s3
  $region1: #{tpu_custom_call.1} parent=0
    #allocation3 [shape = 'u8[393216]{0}', space=vmem, size = 0x60000, scoped, tag = 'input window, operand 0']
    #allocation4 [shape = 's32[2]{0}', space=sflag, size = 0x8, scoped, tag = 'scoped memory for tpu_custom_call.1']
    %7 = vsyncpa [#allocation4], 0
    %s8 = scalar_lea.sflag [#allocation4], 1
    %9 = vsyncpa %s8, 0
    loop: start=0, step=1, limit=6
    $region2: #{tpu_custom_call.1} parent=1 // loop_pre_header
      _
    $region3: #{tpu_custom_call.1} parent=1 // loop_header
      %s11 = sphi 0, %s15
      %p12 = scmp.ge.s32.totalorder %s11, 6
      %s18 = sphi 0, %s37
      %s19 = sphi 0, %s33
      %s20 = sphi 0, %s29
      %s21 = sphi 0, %s18
      %s22 = sphi 0, %s19
      %s23 = sphi 0, %s20
      %s24 = sphi 0, %s21
      %s25 = sphi 0, %s22
      %s26 = sphi 0, %s23
      %s42 = sphi 0, %s44
      %s45 = sphi 0, %s42
      %s46 = sphi 0, %s45
      %s62 = sphi 0, %s46
      %s70 = sphi 0, %s72
      %s73 = sphi 0, %s70
      %s74 = sphi 0, %s73
      %s90 = sphi 0, %s74
      %s98 = sphi 0, %s100
      %s101 = sphi 0, %s98
      %s102 = sphi 0, %s101
      %s118 = sphi 0, %s102
    $region4: #{tpu_custom_call.1} parent=1 // loop_header_branch
      %14 = sbr.rel (%p12) target = $region8
    $region5: #{tpu_custom_call.1} parent=1 // loop_body
      %s16 = ssub.s32 %s11, 1
      %s17 = ssub.s32 %s11, 2
      %s27 = sadd.s32 1, %s20
      %p28 = scmp.ge.s32.totalorder %s27, 1
      %s29 = scalar_select %p28, 0, %s27
      %s30 = sadd.s32 1, %s19
      %s31 = scalar_select %p28, %s30, %s19
      %p32 = scmp.ge.s32.totalorder %s31, 1
      %s33 = scalar_select %p32, 0, %s31
      %s34 = sadd.s32 1, %s18
      %s35 = scalar_select %p32, %s34, %s18
      %p36 = scmp.ge.s32.totalorder %s35, 4
      %s37 = scalar_select %p36, 0, %s35
      %s38 = ssub.s32 %s18, %s37
      %s39 = ssub.s32 %s20, %s29
      %s40 = sor.u32 %s38, %s39
      %p41 = scmp.eq.s32.totalorder %s40, 0
      %s43 = sadd.s32 %s42, 1
      %s44 = scalar_select %p41, %s42, %s43
      %p47 = pneg %p41
      %p48 = scmp.eq.s32.totalorder %s11, 3
      %p49 = por %p47, %p48
      %p50 = scmp.ne.s32.totalorder %s42, %s45
      %p51 = scmp.eq.s32.totalorder %s11, 0
      %p52 = por %p50, %p51
      %p53 = scmp.ne.s32.totalorder %s42, %s45
      %p54 = scmp.eq.s32.totalorder %s16, 3
      %p55 = por %p53, %p54
      %p56 = scmp.ne.s32.totalorder %s45, %s46
      %p57 = scmp.eq.s32.totalorder %s16, 0
      %p58 = por %p56, %p57
      %p59 = scmp.ne.s32.totalorder %s45, %s46
      %p60 = scmp.eq.s32.totalorder %s17, 3
      %p61 = por %p59, %p60
      %p63 = scmp.ne.s32.totalorder %s46, %s62
      %p64 = scmp.eq.s32.totalorder %s17, 0
      %p65 = por %p63, %p64
      %s66 = ssub.s32 %s20, %s29
      %s67 = ssub.s32 %s19, %s33
      %s68 = sor.u32 %s66, %s67
      %p69 = scmp.eq.s32.totalorder %s68, 0
      %s71 = sadd.s32 %s70, 1
      %s72 = scalar_select %p69, %s70, %s71
      %p75 = pneg %p69
      %p76 = scmp.eq.s32.totalorder %s11, 3
      %p77 = por %p75, %p76
      %p78 = scmp.ne.s32.totalorder %s70, %s73
      %p79 = scmp.eq.s32.totalorder %s11, 0
      %p80 = por %p78, %p79
      %p81 = scmp.ne.s32.totalorder %s70, %s73
      %p82 = scmp.eq.s32.totalorder %s16, 3
      %p83 = por %p81, %p82
      %p84 = scmp.ne.s32.totalorder %s73, %s74
      %p85 = scmp.eq.s32.totalorder %s16, 0
      %p86 = por %p84, %p85
      %p87 = scmp.ne.s32.totalorder %s73, %s74
      %p88 = scmp.eq.s32.totalorder %s17, 3
      %p89 = por %p87, %p88
      %p91 = scmp.ne.s32.totalorder %s74, %s90
      %p92 = scmp.eq.s32.totalorder %s17, 0
      %p93 = por %p91, %p92
      %s94 = ssub.s32 %s18, %s37
      %s95 = ssub.s32 %s19, %s33
      %s96 = sor.u32 %s94, %s95
      %p97 = scmp.eq.s32.totalorder %s96, 0
      %s99 = sadd.s32 %s98, 1
      %s100 = scalar_select %p97, %s98, %s99
      %p103 = pneg %p97
      %p104 = scmp.eq.s32.totalorder %s11, 3
      %p105 = por %p103, %p104
      %p106 = scmp.ne.s32.totalorder %s98, %s101
      %p107 = scmp.eq.s32.totalorder %s11, 0
      %p108 = por %p106, %p107
      %p109 = scmp.ne.s32.totalorder %s98, %s101
      %p110 = scmp.eq.s32.totalorder %s16, 3
      %p111 = por %p109, %p110
      %p112 = scmp.ne.s32.totalorder %s101, %s102
      %p113 = scmp.eq.s32.totalorder %s16, 0
      %p114 = por %p112, %p113
      %p115 = scmp.ne.s32.totalorder %s101, %s102
      %p116 = scmp.eq.s32.totalorder %s17, 3
      %p117 = por %p115, %p116
      %p119 = scmp.ne.s32.totalorder %s102, %s118
      %p120 = scmp.eq.s32.totalorder %s17, 0
      %p121 = por %p119, %p120
      %p122 = scmp.le.s32.totalorder 1, %s11
      %p123 = scmp.lt.s32.totalorder %s11, 5
      %p124 = pnand %p122, %p123
      %p125 = pneg %p124
      // Predicated region
      $region9: #{tpu_custom_call.1} parent=5 // pred_check
        _
      $region10: #{tpu_custom_call.1} parent=5 // pred_check_branch
        %127 = sbr.rel (%p124) target = $region12
      $region11: #{tpu_custom_call.1} parent=5 // pred_region
        %s128 = ssub.s32 %s11, 1
        // Predicated region
        $region13: #{tpu_custom_call.1} parent=11 // pred_check
          %p129 = pneg %p86
        $region14: #{tpu_custom_call.1} parent=11 // pred_check_branch
          %131 = sbr.rel (%p129) target = $region16
        $region15: #{tpu_custom_call.1} parent=11 // pred_region
          %s132 = smul.u32 48, %s23
          %p133 = scmp.lt.s32.totalorder %s132, 47
          %s134 = scalar_select %p133, %s132, 47
          %p135 = scmp.lt.s32.totalorder %s22, 0
          %s136 = scalar_select %p135, %s22, 0
          %s137 = sadd.s32 %s136, %s134
          %s138 = smul.addr %s137, 4
          %s139 = scalar_lea.vmem %s1, %s138
          %s140 = smul.u32 48, %s23
        $region16: #{tpu_custom_call.1} parent=11 // pred_fallthru
          _
      $region12: #{tpu_custom_call.1} parent=5 // pred_fallthru
        _
      %p141 = scmp.lt.s32.totalorder %s11, 4
      // Predicated region
      $region17: #{tpu_custom_call.1} parent=5 // pred_check
        %p142 = pneg %p141
      $region18: #{tpu_custom_call.1} parent=5 // pred_check_branch
        %144 = sbr.rel (%p142) target = $region20
      $region19: #{tpu_custom_call.1} parent=5 // pred_region
        // Predicated region
        $region21: #{tpu_custom_call.1} parent=19 // pred_check
          %p145 = pneg %p52
        $region22: #{tpu_custom_call.1} parent=19 // pred_check_branch
          %147 = sbr.rel (%p145) target = $region24
        $region23: #{tpu_custom_call.1} parent=19 // pred_region
          %s148 = sand.u32 %s42, 1
          %s149 = scalar_lea.sflag [#allocation4], %s148
          %s150 = sand.u32 %s42, 1
          %s151 = smul.addr %s150, 384
          %s152 = scalar_lea.vmem [#allocation3], %s151
          %s153 = smul.u32 32, %s18
          %s154 = smul.u32 3, %s20
          %156 = vsyncadd %s149, 0
          %s157 = smul.addr %s153, 3
          %s158 = sadd.s32 %s154, %s157
          %s159 = smul.addr %s158, 4
          %s160 = scalar_lea.hbm %s0, %s159
          %s161 = sshll.u32 %s160, 4
          %s162 = int_to_ptr.hbm [resolvable:$true] %s161
          %s163 = sshll.u32 %s152, 4
          %s164 = int_to_ptr.vmem [resolvable:$true] %s163
          %169 = dma.hbm_to_vmem [thread:$0]  %s162, 6144, %s164, %s149, 192, 192, 12
        $region24: #{tpu_custom_call.1} parent=19 // pred_fallthru
          _
      $region20: #{tpu_custom_call.1} parent=5 // pred_fallthru
        _
      %p170 = scmp.le.s32.totalorder 1, %s11
      %p171 = scmp.lt.s32.totalorder %s11, 5
      %p172 = pnand %p170, %p171
      %p173 = pneg %p172
      // Predicated region
      $region25: #{tpu_custom_call.1} parent=5 // pred_check
        _
      $region26: #{tpu_custom_call.1} parent=5 // pred_check_branch
        %175 = sbr.rel (%p172) target = $region28
      $region27: #{tpu_custom_call.1} parent=5 // pred_region
        %s176 = ssub.s32 %s11, 1
        %s177 = sand.u32 %s45, 1
        %s178 = scalar_lea.sflag [#allocation4], %s177
        %s179 = sand.u32 %s45, 1
        %s180 = smul.addr %s179, 384
        %s181 = scalar_lea.vmem [#allocation3], %s180
        // Predicated region
        $region29: #{tpu_custom_call.1} parent=27 // pred_check
          %p182 = pneg %p58
        $region30: #{tpu_custom_call.1} parent=27 // pred_check_branch
          %184 = sbr.rel (%p182) target = $region32
        $region31: #{tpu_custom_call.1} parent=27 // pred_region
          %186 = dma.done %s178, 6144
        $region32: #{tpu_custom_call.1} parent=27 // pred_fallthru
          _
        %s187 = sand.u32 %s45, 1
        %s188 = scalar_lea.sflag [#allocation4], %s187
        %s189 = sand.u32 %s45, 1
        %s190 = smul.addr %s189, 384
        %s191 = scalar_lea.vmem [#allocation3], %s190
        %p192 = pneg %p58
        %p193 = pneg %p55
        %s194 = smul.u32 48, %s23
        %p195 = scmp.lt.s32.totalorder %s194, 47
        %s196 = scalar_select %p195, %s194, 47
        %p197 = scmp.lt.s32.totalorder %s22, 0
        %s198 = scalar_select %p197, %s22, 0
        %s199 = sadd.s32 %s198, %s196
        %s200 = smul.addr %s199, 4
        %s201 = scalar_lea.vmem %s1, %s200
        %p202 = pneg %p86
        %p203 = pneg %p83
        %p204 = pneg %p114
        %p205 = pneg %p111
        %s206 = smul.u32 32, %s21
        %p207 = scmp.lt.s32.totalorder %s206, 127
        %s208 = scalar_select %p207, %s206, 127
        %p209 = scmp.lt.s32.totalorder %s22, 0
        %s210 = scalar_select %p209, %s22, 0
        %s211 = sadd.s32 %s210, %s208
        %s212 = smul.addr %s211, 8
        %s213 = scalar_lea.vmem %s2, %s212
        %s214 = smul.u32 32, %s21
        %s215 = smul.u32 3, %s23
        %s216 = smul.u32 48, %s23
        %p217 = scmp.lt.s32.totalorder %s216, 47
        %s218 = scalar_select %p217, %s216, 47
        %p219 = scmp.lt.s32.totalorder %s22, 0
        %s220 = scalar_select %p219, %s22, 0
        %s221 = sadd.s32 %s220, %s218
        %s222 = smul.addr %s221, 4
        %s223 = scalar_lea.vmem %s1, %s222
        %s224 = smul.u32 48, %s23
        %s225 = smul.u32 32, %s21
        %p226 = scmp.lt.s32.totalorder %s225, 127
        %s227 = scalar_select %p226, %s225, 127
        %p228 = scmp.lt.s32.totalorder %s22, 0
        %s229 = scalar_select %p228, %s22, 0
        %s230 = sadd.s32 %s229, %s227
        %s231 = smul.addr %s230, 8
        %s232 = scalar_lea.vmem %s2, %s231
        %s233 = smul.u32 32, %s21
        %p234 = scmp.eq.s32.totalorder %s23, 0
        // Predicated region
        $region33: #{tpu_custom_call.1} parent=27 // pred_check
          %p235 = pneg %p234
        $region34: #{tpu_custom_call.1} parent=27 // pred_check_branch
          %237 = sbr.rel (%p235) target = $region36
        $region35: #{tpu_custom_call.1} parent=27 // pred_region
          %vm238 = vcmask 523264
          %239 = vst.msk [vmem:[#allocation2] sm:$0xff] %vm238, 0.0
          %240 = vst.msk [vmem:[#allocation2 + $0x8] sm:$0xff] %vm238, 0.0
          %241 = vst.msk [vmem:[#allocation2 + $0x10] sm:$0xff] %vm238, 0.0
          %242 = vst.msk [vmem:[#allocation2 + $0x18] sm:$0xff] %vm238, 0.0
          %243 = vst.msk [vmem:[#allocation2 + $0x20] sm:$0xff] %vm238, 0.0
          %244 = vst.msk [vmem:[#allocation2 + $0x28] sm:$0xff] %vm238, 0.0
          %245 = vst.msk [vmem:[#allocation2 + $0x30] sm:$0xff] %vm238, 0.0
          %246 = vst.msk [vmem:[#allocation2 + $0x38] sm:$0xff] %vm238, 0.0
          %247 = vst.msk [vmem:[#allocation2 + $0x40] sm:$0xff] %vm238, 0.0
          %248 = vst.msk [vmem:[#allocation2 + $0x48] sm:$0xff] %vm238, 0.0
          %249 = vst.msk [vmem:[#allocation2 + $0x50] sm:$0xff] %vm238, 0.0
          %250 = vst.msk [vmem:[#allocation2 + $0x58] sm:$0xff] %vm238, 0.0
          %251 = vst.msk [vmem:[#allocation2 + $0x60] sm:$0xff] %vm238, 0.0
          %252 = vst.msk [vmem:[#allocation2 + $0x68] sm:$0xff] %vm238, 0.0
          %253 = vst.msk [vmem:[#allocation2 + $0x70] sm:$0xff] %vm238, 0.0
          %254 = vst.msk [vmem:[#allocation2 + $0x78] sm:$0xff] %vm238, 0.0
          %255 = vst.msk [vmem:[#allocation2 + $0x80] sm:$0xff] %vm238, 0.0
          %256 = vst.msk [vmem:[#allocation2 + $0x88] sm:$0xff] %vm238, 0.0
          %257 = vst.msk [vmem:[#allocation2 + $0x90] sm:$0xff] %vm238, 0.0
          %258 = vst.msk [vmem:[#allocation2 + $0x98] sm:$0xff] %vm238, 0.0
          %259 = vst.msk [vmem:[#allocation2 + $0xa0] sm:$0xff] %vm238, 0.0
          %260 = vst.msk [vmem:[#allocation2 + $0xa8] sm:$0xff] %vm238, 0.0
          %261 = vst.msk [vmem:[#allocation2 + $0xb0] sm:$0xff] %vm238, 0.0
          %262 = vst.msk [vmem:[#allocation2 + $0xb8] sm:$0xff] %vm238, 0.0
          %263 = vst.msk [vmem:[#allocation2 + $0xc0] sm:$0xff] %vm238, 0.0
          %264 = vst.msk [vmem:[#allocation2 + $0xc8] sm:$0xff] %vm238, 0.0
          %265 = vst.msk [vmem:[#allocation2 + $0xd0] sm:$0xff] %vm238, 0.0
          %266 = vst.msk [vmem:[#allocation2 + $0xd8] sm:$0xff] %vm238, 0.0
          %267 = vst.msk [vmem:[#allocation2 + $0xe0] sm:$0xff] %vm238, 0.0
          %268 = vst.msk [vmem:[#allocation2 + $0xe8] sm:$0xff] %vm238, 0.0
          %269 = vst.msk [vmem:[#allocation2 + $0xf0] sm:$0xff] %vm238, 0.0
          %270 = vst.msk [vmem:[#allocation2 + $0xf8] sm:$0xff] %vm238, 0.0
        $region36: #{tpu_custom_call.1} parent=27 // pred_fallthru
          _
        %v271 = vld [vmem:[#allocation2] sm:$0xff]
        %v272 = vld [vmem:[#allocation2 + $0x8] sm:$0xff]
        %v273 = vld [vmem:[#allocation2 + $0x10] sm:$0xff]
        %v274 = vld [vmem:[#allocation2 + $0x18] sm:$0xff]
        %v275 = vld [vmem:[#allocation2 + $0x20] sm:$0xff]
        %v276 = vld [vmem:[#allocation2 + $0x28] sm:$0xff]
        %v277 = vld [vmem:[#allocation2 + $0x30] sm:$0xff]
        %v278 = vld [vmem:[#allocation2 + $0x38] sm:$0xff]
        %v279 = vld [vmem:[#allocation2 + $0x40] sm:$0xff]
        %v280 = vld [vmem:[#allocation2 + $0x48] sm:$0xff]
        %v281 = vld [vmem:[#allocation2 + $0x50] sm:$0xff]
        %v282 = vld [vmem:[#allocation2 + $0x58] sm:$0xff]
        %v283 = vld [vmem:[#allocation2 + $0x60] sm:$0xff]
        %v284 = vld [vmem:[#allocation2 + $0x68] sm:$0xff]
        %v285 = vld [vmem:[#allocation2 + $0x70] sm:$0xff]
        %v286 = vld [vmem:[#allocation2 + $0x78] sm:$0xff]
        %v287 = vld [vmem:[#allocation2 + $0x80] sm:$0xff]
        %v288 = vld [vmem:[#allocation2 + $0x88] sm:$0xff]
        %v289 = vld [vmem:[#allocation2 + $0x90] sm:$0xff]
        %v290 = vld [vmem:[#allocation2 + $0x98] sm:$0xff]
        %v291 = vld [vmem:[#allocation2 + $0xa0] sm:$0xff]
        %v292 = vld [vmem:[#allocation2 + $0xa8] sm:$0xff]
        %v293 = vld [vmem:[#allocation2 + $0xb0] sm:$0xff]
        %v294 = vld [vmem:[#allocation2 + $0xb8] sm:$0xff]
        %v295 = vld [vmem:[#allocation2 + $0xc0] sm:$0xff]
        %v296 = vld [vmem:[#allocation2 + $0xc8] sm:$0xff]
        %v297 = vld [vmem:[#allocation2 + $0xd0] sm:$0xff]
        %v298 = vld [vmem:[#allocation2 + $0xd8] sm:$0xff]
        %v299 = vld [vmem:[#allocation2 + $0xe0] sm:$0xff]
        %v300 = vld [vmem:[#allocation2 + $0xe8] sm:$0xff]
        %v301 = vld [vmem:[#allocation2 + $0xf0] sm:$0xff]
        %v302 = vld [vmem:[#allocation2 + $0xf8] sm:$0xff]
        %v303 = vld [vmem:[%s181] sm:$0xff]
        %v304 = vld [vmem:[%s181 + $0x8] sm:$0xf]
        %v305 = vld [vmem:[%s181 + $0xc] sm:$0xff]
        %v306 = vld [vmem:[%s181 + $0x14] sm:$0xf]
        %v307 = vld [vmem:[%s181 + $0x18] sm:$0xff]
        %v308 = vld [vmem:[%s181 + $0x20] sm:$0xf]
        %v309 = vld [vmem:[%s181 + $0x24] sm:$0xff]
        %v310 = vld [vmem:[%s181 + $0x2c] sm:$0xf]
        %v311 = vld [vmem:[%s181 + $0x30] sm:$0xff]
        %v312 = vld [vmem:[%s181 + $0x38] sm:$0xf]
        %v313 = vld [vmem:[%s181 + $0x3c] sm:$0xff]
        %v314 = vld [vmem:[%s181 + $0x44] sm:$0xf]
        %v315 = vld [vmem:[%s181 + $0x48] sm:$0xff]
        %v316 = vld [vmem:[%s181 + $0x50] sm:$0xf]
        %v317 = vld [vmem:[%s181 + $0x54] sm:$0xff]
        %v318 = vld [vmem:[%s181 + $0x5c] sm:$0xf]
        %v319 = vld [vmem:[%s181 + $0x60] sm:$0xff]
        %v320 = vld [vmem:[%s181 + $0x68] sm:$0xf]
        %v321 = vld [vmem:[%s181 + $0x6c] sm:$0xff]
        %v322 = vld [vmem:[%s181 + $0x74] sm:$0xf]
        %v323 = vld [vmem:[%s181 + $0x78] sm:$0xff]
        %v324 = vld [vmem:[%s181 + $0x80] sm:$0xf]
        %v325 = vld [vmem:[%s181 + $0x84] sm:$0xff]
        %v326 = vld [vmem:[%s181 + $0x8c] sm:$0xf]
        %v327 = vld [vmem:[%s181 + $0x90] sm:$0xff]
        %v328 = vld [vmem:[%s181 + $0x98] sm:$0xf]
        %v329 = vld [vmem:[%s181 + $0x9c] sm:$0xff]
        %v330 = vld [vmem:[%s181 + $0xa4] sm:$0xf]
        %v331 = vld [vmem:[%s181 + $0xa8] sm:$0xff]
        %v332 = vld [vmem:[%s181 + $0xb0] sm:$0xf]
        %v333 = vld [vmem:[%s181 + $0xb4] sm:$0xff]
        %v334 = vld [vmem:[%s181 + $0xbc] sm:$0xf]
        %v335 = vld [vmem:[%s181 + $0xc0] sm:$0xff]
        %v336 = vld [vmem:[%s181 + $0xc8] sm:$0xf]
        %v337 = vld [vmem:[%s181 + $0xcc] sm:$0xff]
        %v338 = vld [vmem:[%s181 + $0xd4] sm:$0xf]
        %v339 = vld [vmem:[%s181 + $0xd8] sm:$0xff]
        %v340 = vld [vmem:[%s181 + $0xe0] sm:$0xf]
        %v341 = vld [vmem:[%s181 + $0xe4] sm:$0xff]
        %v342 = vld [vmem:[%s181 + $0xec] sm:$0xf]
        %v343 = vld [vmem:[%s181 + $0xf0] sm:$0xff]
        %v344 = vld [vmem:[%s181 + $0xf8] sm:$0xf]
        %v345 = vld [vmem:[%s181 + $0xfc] sm:$0xff]
        %v346 = vld [vmem:[%s181 + $0x104] sm:$0xf]
        %v347 = vld [vmem:[%s181 + $0x108] sm:$0xff]
        %v348 = vld [vmem:[%s181 + $0x110] sm:$0xf]
        %v349 = vld [vmem:[%s181 + $0x114] sm:$0xff]
        %v350 = vld [vmem:[%s181 + $0x11c] sm:$0xf]
        %v351 = vld [vmem:[%s181 + $0x120] sm:$0xff]
        %v352 = vld [vmem:[%s181 + $0x128] sm:$0xf]
        %v353 = vld [vmem:[%s181 + $0x12c] sm:$0xff]
        %v354 = vld [vmem:[%s181 + $0x134] sm:$0xf]
        %v355 = vld [vmem:[%s181 + $0x138] sm:$0xff]
        %v356 = vld [vmem:[%s181 + $0x140] sm:$0xf]
        %v357 = vld [vmem:[%s181 + $0x144] sm:$0xff]
        %v358 = vld [vmem:[%s181 + $0x14c] sm:$0xf]
        %v359 = vld [vmem:[%s181 + $0x150] sm:$0xff]
        %v360 = vld [vmem:[%s181 + $0x158] sm:$0xf]
        %v361 = vld [vmem:[%s181 + $0x15c] sm:$0xff]
        %v362 = vld [vmem:[%s181 + $0x164] sm:$0xf]
        %v363 = vld [vmem:[%s181 + $0x168] sm:$0xff]
        %v364 = vld [vmem:[%s181 + $0x170] sm:$0xf]
        %v365 = vld [vmem:[%s181 + $0x174] sm:$0xff]
        %v366 = vld [vmem:[%s181 + $0x17c] sm:$0xf]
        %v367 = vld [vmem:[%s223] sm:$0xf]
        %v368 = vld [vmem:[%s223 + $0x4] sm:$0xf]
        %v369 = vld [vmem:[%s223 + $0x8] sm:$0xf]
        %v370 = vld [vmem:[%s223 + $0xc] sm:$0xf]
        %v371 = vld [vmem:[%s223 + $0x10] sm:$0xf]
        %v372 = vld [vmem:[%s223 + $0x14] sm:$0xf]
        %v373 = vld [vmem:[%s223 + $0x18] sm:$0xf]
        %v374 = vld [vmem:[%s223 + $0x1c] sm:$0xf]
        %v375 = vld [vmem:[%s223 + $0x20] sm:$0xf]
        %v376 = vld [vmem:[%s223 + $0x24] sm:$0xf]
        %v377 = vld [vmem:[%s223 + $0x28] sm:$0xf]
        %v378 = vld [vmem:[%s223 + $0x2c] sm:$0xf]
        %v379 = vld [vmem:[%s223 + $0x30] sm:$0xf]
        %v380 = vld [vmem:[%s223 + $0x34] sm:$0xf]
        %v381 = vld [vmem:[%s223 + $0x38] sm:$0xf]
        %v382 = vld [vmem:[%s223 + $0x3c] sm:$0xf]
        %v383 = vld [vmem:[%s223 + $0x40] sm:$0xf]
        %v384 = vld [vmem:[%s223 + $0x44] sm:$0xf]
        %v385 = vld [vmem:[%s223 + $0x48] sm:$0xf]
        %v386 = vld [vmem:[%s223 + $0x4c] sm:$0xf]
        %v387 = vld [vmem:[%s223 + $0x50] sm:$0xf]
        %v388 = vld [vmem:[%s223 + $0x54] sm:$0xf]
        %v389 = vld [vmem:[%s223 + $0x58] sm:$0xf]
        %v390 = vld [vmem:[%s223 + $0x5c] sm:$0xf]
        %v391 = vld [vmem:[%s223 + $0x60] sm:$0xf]
        %v392 = vld [vmem:[%s223 + $0x64] sm:$0xf]
        %v393 = vld [vmem:[%s223 + $0x68] sm:$0xf]
        %v394 = vld [vmem:[%s223 + $0x6c] sm:$0xf]
        %v395 = vld [vmem:[%s223 + $0x70] sm:$0xf]
        %v396 = vld [vmem:[%s223 + $0x74] sm:$0xf]
        %v397 = vld [vmem:[%s223 + $0x78] sm:$0xf]
        %v398 = vld [vmem:[%s223 + $0x7c] sm:$0xf]
        %v399 = vld [vmem:[%s223 + $0x80] sm:$0xf]
        %v400 = vld [vmem:[%s223 + $0x84] sm:$0xf]
        %v401 = vld [vmem:[%s223 + $0x88] sm:$0xf]
        %v402 = vld [vmem:[%s223 + $0x8c] sm:$0xf]
        %v403 = vld [vmem:[%s223 + $0x90] sm:$0xf]
        %v404 = vld [vmem:[%s223 + $0x94] sm:$0xf]
        %v405 = vld [vmem:[%s223 + $0x98] sm:$0xf]
        %v406 = vld [vmem:[%s223 + $0x9c] sm:$0xf]
        %v407 = vld [vmem:[%s223 + $0xa0] sm:$0xf]
        %v408 = vld [vmem:[%s223 + $0xa4] sm:$0xf]
        %v409 = vld [vmem:[%s223 + $0xa8] sm:$0xf]
        %v410 = vld [vmem:[%s223 + $0xac] sm:$0xf]
        %v411 = vld [vmem:[%s223 + $0xb0] sm:$0xf]
        %v412 = vld [vmem:[%s223 + $0xb4] sm:$0xf]
        %v413 = vld [vmem:[%s223 + $0xb8] sm:$0xf]
        %v414 = vld [vmem:[%s223 + $0xbc] sm:$0xf]
        %v479 = vunpack.c.l.b16 %v303
        %v480 = vunpack.c.h.b16 %v303
        %v481 = vunpack.c.l.b16 %v304
        %v482 = vunpack.c.l.b16 %v305
        %v483 = vunpack.c.h.b16 %v305
        %v484 = vunpack.c.l.b16 %v306
        %v485 = vunpack.c.l.b16 %v307
        %v486 = vunpack.c.h.b16 %v307
        %v487 = vunpack.c.l.b16 %v308
        %v488 = vunpack.c.l.b16 %v309
        %v489 = vunpack.c.h.b16 %v309
        %v490 = vunpack.c.l.b16 %v310
        %v491 = vunpack.c.l.b16 %v311
        %v492 = vunpack.c.h.b16 %v311
        %v493 = vunpack.c.l.b16 %v312
        %v494 = vunpack.c.l.b16 %v313
        %v495 = vunpack.c.h.b16 %v313
        %v496 = vunpack.c.l.b16 %v314
        %v497 = vunpack.c.l.b16 %v315
        %v498 = vunpack.c.h.b16 %v315
        %v499 = vunpack.c.l.b16 %v316
        %v500 = vunpack.c.l.b16 %v317
        %v501 = vunpack.c.h.b16 %v317
        %v502 = vunpack.c.l.b16 %v318
        %v503 = vunpack.c.l.b16 %v319
        %v504 = vunpack.c.h.b16 %v319
        %v505 = vunpack.c.l.b16 %v320
        %v506 = vunpack.c.l.b16 %v321
        %v507 = vunpack.c.h.b16 %v321
        %v508 = vunpack.c.l.b16 %v322
        %v509 = vunpack.c.l.b16 %v323
        %v510 = vunpack.c.h.b16 %v323
        %v511 = vunpack.c.l.b16 %v324
        %v512 = vunpack.c.l.b16 %v325
        %v513 = vunpack.c.h.b16 %v325
        %v514 = vunpack.c.l.b16 %v326
        %v515 = vunpack.c.l.b16 %v327
        %v516 = vunpack.c.h.b16 %v327
        %v517 = vunpack.c.l.b16 %v328
        %v518 = vunpack.c.l.b16 %v329
        %v519 = vunpack.c.h.b16 %v329
        %v520 = vunpack.c.l.b16 %v330
        %v521 = vunpack.c.l.b16 %v331
        %v522 = vunpack.c.h.b16 %v331
        %v523 = vunpack.c.l.b16 %v332
        %v524 = vunpack.c.l.b16 %v333
        %v525 = vunpack.c.h.b16 %v333
        %v526 = vunpack.c.l.b16 %v334
        %v527 = vunpack.c.l.b16 %v335
        %v528 = vunpack.c.h.b16 %v335
        %v529 = vunpack.c.l.b16 %v336
        %v530 = vunpack.c.l.b16 %v337
        %v531 = vunpack.c.h.b16 %v337
        %v532 = vunpack.c.l.b16 %v338
        %v533 = vunpack.c.l.b16 %v339
        %v534 = vunpack.c.h.b16 %v339
        %v535 = vunpack.c.l.b16 %v340
        %v536 = vunpack.c.l.b16 %v341
        %v537 = vunpack.c.h.b16 %v341
        %v538 = vunpack.c.l.b16 %v342
        %v539 = vunpack.c.l.b16 %v343
        %v540 = vunpack.c.h.b16 %v343
        %v541 = vunpack.c.l.b16 %v344
        %v542 = vunpack.c.l.b16 %v345
        %v543 = vunpack.c.h.b16 %v345
        %v544 = vunpack.c.l.b16 %v346
        %v545 = vunpack.c.l.b16 %v347
        %v546 = vunpack.c.h.b16 %v347
        %v547 = vunpack.c.l.b16 %v348
        %v548 = vunpack.c.l.b16 %v349
        %v549 = vunpack.c.h.b16 %v349
        %v550 = vunpack.c.l.b16 %v350
        %v551 = vunpack.c.l.b16 %v351
        %v552 = vunpack.c.h.b16 %v351
        %v553 = vunpack.c.l.b16 %v352
        %v554 = vunpack.c.l.b16 %v353
        %v555 = vunpack.c.h.b16 %v353
        %v556 = vunpack.c.l.b16 %v354
        %v557 = vunpack.c.l.b16 %v355
        %v558 = vunpack.c.h.b16 %v355
        %v559 = vunpack.c.l.b16 %v356
        %v560 = vunpack.c.l.b16 %v357
        %v561 = vunpack.c.h.b16 %v357
        %v562 = vunpack.c.l.b16 %v358
        %v563 = vunpack.c.l.b16 %v359
        %v564 = vunpack.c.h.b16 %v359
        %v565 = vunpack.c.l.b16 %v360
        %v566 = vunpack.c.l.b16 %v361
        %v567 = vunpack.c.h.b16 %v361
        %v568 = vunpack.c.l.b16 %v362
        %v569 = vunpack.c.l.b16 %v363
        %v570 = vunpack.c.h.b16 %v363
        %v571 = vunpack.c.l.b16 %v364
        %v572 = vunpack.c.l.b16 %v365
        %v573 = vunpack.c.h.b16 %v365
        %v574 = vunpack.c.l.b16 %v366
        %v575 = vpack.c.b16 %v482, %v479
        %v576 = vpack.c.b16 %v483, %v480
        %v577 = vpack.c.b16 %v484, %v481
        %v578 = vpack.c.b16 %v488, %v485
        %v579 = vpack.c.b16 %v489, %v486
        %v580 = vpack.c.b16 %v490, %v487
        %v581 = vpack.c.b16 %v494, %v491
        %v582 = vpack.c.b16 %v495, %v492
        %v583 = vpack.c.b16 %v496, %v493
        %v584 = vpack.c.b16 %v500, %v497
        %v585 = vpack.c.b16 %v501, %v498
        %v586 = vpack.c.b16 %v502, %v499
        %v587 = vpack.c.b16 %v506, %v503
        %v588 = vpack.c.b16 %v507, %v504
        %v589 = vpack.c.b16 %v508, %v505
        %v590 = vpack.c.b16 %v512, %v509
        %v591 = vpack.c.b16 %v513, %v510
        %v592 = vpack.c.b16 %v514, %v511
        %v593 = vpack.c.b16 %v518, %v515
        %v594 = vpack.c.b16 %v519, %v516
        %v595 = vpack.c.b16 %v520, %v517
        %v596 = vpack.c.b16 %v524, %v521
        %v597 = vpack.c.b16 %v525, %v522
        %v598 = vpack.c.b16 %v526, %v523
        %v599 = vpack.c.b16 %v530, %v527
        %v600 = vpack.c.b16 %v531, %v528
        %v601 = vpack.c.b16 %v532, %v529
        %v602 = vpack.c.b16 %v536, %v533
        %v603 = vpack.c.b16 %v537, %v534
        %v604 = vpack.c.b16 %v538, %v535
        %v605 = vpack.c.b16 %v542, %v539
        %v606 = vpack.c.b16 %v543, %v540
        %v607 = vpack.c.b16 %v544, %v541
        %v608 = vpack.c.b16 %v548, %v545
        %v609 = vpack.c.b16 %v549, %v546
        %v610 = vpack.c.b16 %v550, %v547
        %v611 = vpack.c.b16 %v554, %v551
        %v612 = vpack.c.b16 %v555, %v552
        %v613 = vpack.c.b16 %v556, %v553
        %v614 = vpack.c.b16 %v560, %v557
        %v615 = vpack.c.b16 %v561, %v558
        %v616 = vpack.c.b16 %v562, %v559
        %v617 = vpack.c.b16 %v566, %v563
        %v618 = vpack.c.b16 %v567, %v564
        %v619 = vpack.c.b16 %v568, %v565
        %v620 = vpack.c.b16 %v572, %v569
        %v621 = vpack.c.b16 %v573, %v570
        %v622 = vpack.c.b16 %v574, %v571
        %v719 = vunpack.c.l.b16 %v367
        %v720 = vunpack.c.l.b16 %v368
        %v721 = vunpack.c.l.b16 %v369
        %v722 = vunpack.c.l.b16 %v370
        %v723 = vunpack.c.l.b16 %v371
        %v724 = vunpack.c.l.b16 %v372
        %v725 = vunpack.c.l.b16 %v373
        %v726 = vunpack.c.l.b16 %v374
        %v727 = vunpack.c.l.b16 %v375
        %v728 = vunpack.c.l.b16 %v376
        %v729 = vunpack.c.l.b16 %v377
        %v730 = vunpack.c.l.b16 %v378
        %v731 = vunpack.c.l.b16 %v379
        %v732 = vunpack.c.l.b16 %v380
        %v733 = vunpack.c.l.b16 %v381
        %v734 = vunpack.c.l.b16 %v382
        %v735 = vunpack.c.l.b16 %v383
        %v736 = vunpack.c.l.b16 %v384
        %v737 = vunpack.c.l.b16 %v385
        %v738 = vunpack.c.l.b16 %v386
        %v739 = vunpack.c.l.b16 %v387
        %v740 = vunpack.c.l.b16 %v388
        %v741 = vunpack.c.l.b16 %v389
        %v742 = vunpack.c.l.b16 %v390
        %v743 = vunpack.c.l.b16 %v391
        %v744 = vunpack.c.l.b16 %v392
        %v745 = vunpack.c.l.b16 %v393
        %v746 = vunpack.c.l.b16 %v394
        %v747 = vunpack.c.l.b16 %v395
        %v748 = vunpack.c.l.b16 %v396
        %v749 = vunpack.c.l.b16 %v397
        %v750 = vunpack.c.l.b16 %v398
        %v751 = vunpack.c.l.b16 %v399
        %v752 = vunpack.c.l.b16 %v400
        %v753 = vunpack.c.l.b16 %v401
        %v754 = vunpack.c.l.b16 %v402
        %v755 = vunpack.c.l.b16 %v403
        %v756 = vunpack.c.l.b16 %v404
        %v757 = vunpack.c.l.b16 %v405
        %v758 = vunpack.c.l.b16 %v406
        %v759 = vunpack.c.l.b16 %v407
        %v760 = vunpack.c.l.b16 %v408
        %v761 = vunpack.c.l.b16 %v409
        %v762 = vunpack.c.l.b16 %v410
        %v763 = vunpack.c.l.b16 %v411
        %v764 = vunpack.c.l.b16 %v412
        %v765 = vunpack.c.l.b16 %v413
        %v766 = vunpack.c.l.b16 %v414
        %v767 = vpack.c.b16 %v720, %v719
        %v768 = vpack.c.b16 %v722, %v721
        %v769 = vpack.c.b16 %v724, %v723
        %v770 = vpack.c.b16 %v726, %v725
        %v771 = vpack.c.b16 %v728, %v727
        %v772 = vpack.c.b16 %v730, %v729
        %v773 = vpack.c.b16 %v732, %v731
        %v774 = vpack.c.b16 %v734, %v733
        %v775 = vpack.c.b16 %v736, %v735
        %v776 = vpack.c.b16 %v738, %v737
        %v777 = vpack.c.b16 %v740, %v739
        %v778 = vpack.c.b16 %v742, %v741
        %v779 = vpack.c.b16 %v744, %v743
        %v780 = vpack.c.b16 %v746, %v745
        %v781 = vpack.c.b16 %v748, %v747
        %v782 = vpack.c.b16 %v750, %v749
        %v783 = vpack.c.b16 %v752, %v751
        %v784 = vpack.c.b16 %v754, %v753
        %v785 = vpack.c.b16 %v756, %v755
        %v786 = vpack.c.b16 %v758, %v757
        %v787 = vpack.c.b16 %v760, %v759
        %v788 = vpack.c.b16 %v762, %v761
        %v789 = vpack.c.b16 %v764, %v763
        %v790 = vpack.c.b16 %v766, %v765
        %815 = vmatpush.bf16.msra.mxu0 %v774
        %816 = vmatpush.bf16.msra.mxu0 %v773
        %817 = vmatpush.bf16.msra.mxu0 %v772
        %818 = vmatpush.bf16.msra.mxu0 %v771
        %819 = vmatpush.bf16.msra.mxu0 %v770
        %820 = vmatpush.bf16.msra.mxu0 %v769
        %821 = vmatpush.bf16.msra.mxu0 %v768
        %822 = vmatpush.bf16.msra.mxu0 %v767
        %823 = vmatmul.bf16.gmra.mxu0 %v575
        %v824 = vpop.f32.mrf.mxu0
        %v825 = vadd.f32 0.0, %v824
        %v826 = vpop.f32.mrf.mxu0
        %v827 = vadd.f32 0.0, %v826
        %828 = vmatmul.bf16.gmra.mxu0 %v578
        %v829 = vpop.f32.mrf.mxu0
        %v830 = vadd.f32 0.0, %v829
        %v831 = vpop.f32.mrf.mxu0
        %v832 = vadd.f32 0.0, %v831
        %833 = vmatmul.bf16.gmra.mxu0 %v581
        %v834 = vpop.f32.mrf.mxu0
        %v835 = vadd.f32 0.0, %v834
        %v836 = vpop.f32.mrf.mxu0
        %v837 = vadd.f32 0.0, %v836
        %838 = vmatmul.bf16.gmra.mxu0 %v584
        %v839 = vpop.f32.mrf.mxu0
        %v840 = vadd.f32 0.0, %v839
        %v841 = vpop.f32.mrf.mxu0
        %v842 = vadd.f32 0.0, %v841
        %843 = vmatmul.bf16.gmra.mxu0 %v587
        %v844 = vpop.f32.mrf.mxu0
        %v845 = vadd.f32 0.0, %v844
        %v846 = vpop.f32.mrf.mxu0
        %v847 = vadd.f32 0.0, %v846
        %848 = vmatmul.bf16.gmra.mxu0 %v590
        %v849 = vpop.f32.mrf.mxu0
        %v850 = vadd.f32 0.0, %v849
        %v851 = vpop.f32.mrf.mxu0
        %v852 = vadd.f32 0.0, %v851
        %853 = vmatmul.bf16.gmra.mxu0 %v593
        %v854 = vpop.f32.mrf.mxu0
        %v855 = vadd.f32 0.0, %v854
        %v856 = vpop.f32.mrf.mxu0
        %v857 = vadd.f32 0.0, %v856
        %858 = vmatmul.bf16.gmra.mxu0 %v596
        %v859 = vpop.f32.mrf.mxu0
        %v860 = vadd.f32 0.0, %v859
        %v861 = vpop.f32.mrf.mxu0
        %v862 = vadd.f32 0.0, %v861
        %863 = vmatmul.bf16.gmra.mxu0 %v599
        %v864 = vpop.f32.mrf.mxu0
        %v865 = vadd.f32 0.0, %v864
        %v866 = vpop.f32.mrf.mxu0
        %v867 = vadd.f32 0.0, %v866
        %868 = vmatmul.bf16.gmra.mxu0 %v602
        %v869 = vpop.f32.mrf.mxu0
        %v870 = vadd.f32 0.0, %v869
        %v871 = vpop.f32.mrf.mxu0
        %v872 = vadd.f32 0.0, %v871
        %873 = vmatmul.bf16.gmra.mxu0 %v605
        %v874 = vpop.f32.mrf.mxu0
        %v875 = vadd.f32 0.0, %v874
        %v876 = vpop.f32.mrf.mxu0
        %v877 = vadd.f32 0.0, %v876
        %878 = vmatmul.bf16.gmra.mxu0 %v608
        %v879 = vpop.f32.mrf.mxu0
        %v880 = vadd.f32 0.0, %v879
        %v881 = vpop.f32.mrf.mxu0
        %v882 = vadd.f32 0.0, %v881
        %883 = vmatmul.bf16.gmra.mxu0 %v611
        %v884 = vpop.f32.mrf.mxu0
        %v885 = vadd.f32 0.0, %v884
        %v886 = vpop.f32.mrf.mxu0
        %v887 = vadd.f32 0.0, %v886
        %888 = vmatmul.bf16.gmra.mxu0 %v614
        %v889 = vpop.f32.mrf.mxu0
        %v890 = vadd.f32 0.0, %v889
        %v891 = vpop.f32.mrf.mxu0
        %v892 = vadd.f32 0.0, %v891
        %893 = vmatmul.bf16.gmra.mxu0 %v617
        %v894 = vpop.f32.mrf.mxu0
        %v895 = vadd.f32 0.0, %v894
        %v896 = vpop.f32.mrf.mxu0
        %v897 = vadd.f32 0.0, %v896
        %898 = vmatmul.bf16.gmra.mxu0 %v620
        %v899 = vpop.f32.mrf.mxu0
        %v900 = vadd.f32 0.0, %v899
        %v901 = vpop.f32.mrf.mxu0
        %v902 = vadd.f32 0.0, %v901
        %903 = vdwg.mxu0
        %904 = vmatpush.bf16.msra.mxu0 %v782
        %905 = vmatpush.bf16.msra.mxu0 %v781
        %906 = vmatpush.bf16.msra.mxu0 %v780
        %907 = vmatpush.bf16.msra.mxu0 %v779
        %908 = vmatpush.bf16.msra.mxu0 %v778
        %909 = vmatpush.bf16.msra.mxu0 %v777
        %910 = vmatpush.bf16.msra.mxu0 %v776
        %911 = vmatpush.bf16.msra.mxu0 %v775
        %912 = vmatmul.bf16.gmra.mxu0 %v576
        %v913 = vpop.f32.mrf.mxu0
        %v914 = vadd.f32 %v825, %v913
        %v915 = vpop.f32.mrf.mxu0
        %v916 = vadd.f32 %v827, %v915
        %917 = vmatmul.bf16.gmra.mxu0 %v579
        %v918 = vpop.f32.mrf.mxu0
        %v919 = vadd.f32 %v830, %v918
        %v920 = vpop.f32.mrf.mxu0
        %v921 = vadd.f32 %v832, %v920
        %922 = vmatmul.bf16.gmra.mxu0 %v582
        %v923 = vpop.f32.mrf.mxu0
        %v924 = vadd.f32 %v835, %v923
        %v925 = vpop.f32.mrf.mxu0
        %v926 = vadd.f32 %v837, %v925
        %927 = vmatmul.bf16.gmra.mxu0 %v585
        %v928 = vpop.f32.mrf.mxu0
        %v929 = vadd.f32 %v840, %v928
        %v930 = vpop.f32.mrf.mxu0
        %v931 = vadd.f32 %v842, %v930
        %932 = vmatmul.bf16.gmra.mxu0 %v588
        %v933 = vpop.f32.mrf.mxu0
        %v934 = vadd.f32 %v845, %v933
        %v935 = vpop.f32.mrf.mxu0
        %v936 = vadd.f32 %v847, %v935
        %937 = vmatmul.bf16.gmra.mxu0 %v591
        %v938 = vpop.f32.mrf.mxu0
        %v939 = vadd.f32 %v850, %v938
        %v940 = vpop.f32.mrf.mxu0
        %v941 = vadd.f32 %v852, %v940
        %942 = vmatmul.bf16.gmra.mxu0 %v594
        %v943 = vpop.f32.mrf.mxu0
        %v944 = vadd.f32 %v855, %v943
        %v945 = vpop.f32.mrf.mxu0
        %v946 = vadd.f32 %v857, %v945
        %947 = vmatmul.bf16.gmra.mxu0 %v597
        %v948 = vpop.f32.mrf.mxu0
        %v949 = vadd.f32 %v860, %v948
        %v950 = vpop.f32.mrf.mxu0
        %v951 = vadd.f32 %v862, %v950
        %952 = vmatmul.bf16.gmra.mxu0 %v600
        %v953 = vpop.f32.mrf.mxu0
        %v954 = vadd.f32 %v865, %v953
        %v955 = vpop.f32.mrf.mxu0
        %v956 = vadd.f32 %v867, %v955
        %957 = vmatmul.bf16.gmra.mxu0 %v603
        %v958 = vpop.f32.mrf.mxu0
        %v959 = vadd.f32 %v870, %v958
        %v960 = vpop.f32.mrf.mxu0
        %v961 = vadd.f32 %v872, %v960
        %962 = vmatmul.bf16.gmra.mxu0 %v606
        %v963 = vpop.f32.mrf.mxu0
        %v964 = vadd.f32 %v875, %v963
        %v965 = vpop.f32.mrf.mxu0
        %v966 = vadd.f32 %v877, %v965
        %967 = vmatmul.bf16.gmra.mxu0 %v609
        %v968 = vpop.f32.mrf.mxu0
        %v969 = vadd.f32 %v880, %v968
        %v970 = vpop.f32.mrf.mxu0
        %v971 = vadd.f32 %v882, %v970
        %972 = vmatmul.bf16.gmra.mxu0 %v612
        %v973 = vpop.f32.mrf.mxu0
        %v974 = vadd.f32 %v885, %v973
        %v975 = vpop.f32.mrf.mxu0
        %v976 = vadd.f32 %v887, %v975
        %977 = vmatmul.bf16.gmra.mxu0 %v615
        %v978 = vpop.f32.mrf.mxu0
        %v979 = vadd.f32 %v890, %v978
        %v980 = vpop.f32.mrf.mxu0
        %v981 = vadd.f32 %v892, %v980
        %982 = vmatmul.bf16.gmra.mxu0 %v618
        %v983 = vpop.f32.mrf.mxu0
        %v984 = vadd.f32 %v895, %v983
        %v985 = vpop.f32.mrf.mxu0
        %v986 = vadd.f32 %v897, %v985
        %987 = vmatmul.bf16.gmra.mxu0 %v621
        %v988 = vpop.f32.mrf.mxu0
        %v989 = vadd.f32 %v900, %v988
        %v990 = vpop.f32.mrf.mxu0
        %v991 = vadd.f32 %v902, %v990
        %992 = vdwg.mxu0
        %993 = vmatpush.bf16.msra.mxu0 %v790
        %994 = vmatpush.bf16.msra.mxu0 %v789
        %995 = vmatpush.bf16.msra.mxu0 %v788
        %996 = vmatpush.bf16.msra.mxu0 %v787
        %997 = vmatpush.bf16.msra.mxu0 %v786
        %998 = vmatpush.bf16.msra.mxu0 %v785
        %999 = vmatpush.bf16.msra.mxu0 %v784
        %1000 = vmatpush.bf16.msra.mxu0 %v783
        %1001 = vmatmul.bf16.gmra.mxu0 %v577
        %v1002 = vpop.f32.mrf.mxu0
        %v1003 = vadd.f32 %v914, %v1002
        %v1004 = vpop.f32.mrf.mxu0
        %v1005 = vadd.f32 %v916, %v1004
        %1006 = vmatmul.bf16.gmra.mxu0 %v580
        %v1007 = vpop.f32.mrf.mxu0
        %v1008 = vadd.f32 %v919, %v1007
        %v1009 = vpop.f32.mrf.mxu0
        %v1010 = vadd.f32 %v921, %v1009
        %1011 = vmatmul.bf16.gmra.mxu0 %v583
        %v1012 = vpop.f32.mrf.mxu0
        %v1013 = vadd.f32 %v924, %v1012
        %v1014 = vpop.f32.mrf.mxu0
        %v1015 = vadd.f32 %v926, %v1014
        %1016 = vmatmul.bf16.gmra.mxu0 %v586
        %v1017 = vpop.f32.mrf.mxu0
        %v1018 = vadd.f32 %v929, %v1017
        %v1019 = vpop.f32.mrf.mxu0
        %v1020 = vadd.f32 %v931, %v1019
        %1021 = vmatmul.bf16.gmra.mxu0 %v589
        %v1022 = vpop.f32.mrf.mxu0
        %v1023 = vadd.f32 %v934, %v1022
        %v1024 = vpop.f32.mrf.mxu0
        %v1025 = vadd.f32 %v936, %v1024
        %1026 = vmatmul.bf16.gmra.mxu0 %v592
        %v1027 = vpop.f32.mrf.mxu0
        %v1028 = vadd.f32 %v939, %v1027
        %v1029 = vpop.f32.mrf.mxu0
        %v1030 = vadd.f32 %v941, %v1029
        %1031 = vmatmul.bf16.gmra.mxu0 %v595
        %v1032 = vpop.f32.mrf.mxu0
        %v1033 = vadd.f32 %v944, %v1032
        %v1034 = vpop.f32.mrf.mxu0
        %v1035 = vadd.f32 %v946, %v1034
        %1036 = vmatmul.bf16.gmra.mxu0 %v598
        %v1037 = vpop.f32.mrf.mxu0
        %v1038 = vadd.f32 %v949, %v1037
        %v1039 = vpop.f32.mrf.mxu0
        %v1040 = vadd.f32 %v951, %v1039
        %1041 = vmatmul.bf16.gmra.mxu0 %v601
        %v1042 = vpop.f32.mrf.mxu0
        %v1043 = vadd.f32 %v954, %v1042
        %v1044 = vpop.f32.mrf.mxu0
        %v1045 = vadd.f32 %v956, %v1044
        %1046 = vmatmul.bf16.gmra.mxu0 %v604
        %v1047 = vpop.f32.mrf.mxu0
        %v1048 = vadd.f32 %v959, %v1047
        %v1049 = vpop.f32.mrf.mxu0
        %v1050 = vadd.f32 %v961, %v1049
        %1051 = vmatmul.bf16.gmra.mxu0 %v607
        %v1052 = vpop.f32.mrf.mxu0
        %v1053 = vadd.f32 %v964, %v1052
        %v1054 = vpop.f32.mrf.mxu0
        %v1055 = vadd.f32 %v966, %v1054
        %1056 = vmatmul.bf16.gmra.mxu0 %v610
        %v1057 = vpop.f32.mrf.mxu0
        %v1058 = vadd.f32 %v969, %v1057
        %v1059 = vpop.f32.mrf.mxu0
        %v1060 = vadd.f32 %v971, %v1059
        %1061 = vmatmul.bf16.gmra.mxu0 %v613
        %v1062 = vpop.f32.mrf.mxu0
        %v1063 = vadd.f32 %v974, %v1062
        %v1064 = vpop.f32.mrf.mxu0
        %v1065 = vadd.f32 %v976, %v1064
        %1066 = vmatmul.bf16.gmra.mxu0 %v616
        %v1067 = vpop.f32.mrf.mxu0
        %v1068 = vadd.f32 %v979, %v1067
        %v1069 = vpop.f32.mrf.mxu0
        %v1070 = vadd.f32 %v981, %v1069
        %1071 = vmatmul.bf16.gmra.mxu0 %v619
        %v1072 = vpop.f32.mrf.mxu0
        %v1073 = vadd.f32 %v984, %v1072
        %v1074 = vpop.f32.mrf.mxu0
        %v1075 = vadd.f32 %v986, %v1074
        %1076 = vmatmul.bf16.gmra.mxu0 %v622
        %v1077 = vpop.f32.mrf.mxu0
        %v1078 = vadd.f32 %v989, %v1077
        %v1079 = vpop.f32.mrf.mxu0
        %v1080 = vadd.f32 %v991, %v1079
        %1081 = vdwg.mxu0
        %v1082 = vadd.f32 %v271, %v1003
        %v1083 = vadd.f32 %v272, %v1005
        %v1084 = vadd.f32 %v273, %v1008
        %v1085 = vadd.f32 %v274, %v1010
        %v1086 = vadd.f32 %v275, %v1013
        %v1087 = vadd.f32 %v276, %v1015
        %v1088 = vadd.f32 %v277, %v1018
        %v1089 = vadd.f32 %v278, %v1020
        %v1090 = vadd.f32 %v279, %v1023
        %v1091 = vadd.f32 %v280, %v1025
        %v1092 = vadd.f32 %v281, %v1028
        %v1093 = vadd.f32 %v282, %v1030
        %v1094 = vadd.f32 %v283, %v1033
        %v1095 = vadd.f32 %v284, %v1035
        %v1096 = vadd.f32 %v285, %v1038
        %v1097 = vadd.f32 %v286, %v1040
        %v1098 = vadd.f32 %v287, %v1043
        %v1099 = vadd.f32 %v288, %v1045
        %v1100 = vadd.f32 %v289, %v1048
        %v1101 = vadd.f32 %v290, %v1050
        %v1102 = vadd.f32 %v291, %v1053
        %v1103 = vadd.f32 %v292, %v1055
        %v1104 = vadd.f32 %v293, %v1058
        %v1105 = vadd.f32 %v294, %v1060
        %v1106 = vadd.f32 %v295, %v1063
        %v1107 = vadd.f32 %v296, %v1065
        %v1108 = vadd.f32 %v297, %v1068
        %v1109 = vadd.f32 %v298, %v1070
        %v1110 = vadd.f32 %v299, %v1073
        %v1111 = vadd.f32 %v300, %v1075
        %v1112 = vadd.f32 %v301, %v1078
        %v1113 = vadd.f32 %v302, %v1080
        %vm1114 = vcmask 523264
        %1115 = vst.msk [vmem:[#allocation2] sm:$0xff] %vm1114, %v1082
        %1116 = vst.msk [vmem:[#allocation2 + $0x8] sm:$0xff] %vm1114, %v1083
        %1117 = vst.msk [vmem:[#allocation2 + $0x10] sm:$0xff] %vm1114, %v1084
        %1118 = vst.msk [vmem:[#allocation2 + $0x18] sm:$0xff] %vm1114, %v1085
        %1119 = vst.msk [vmem:[#allocation2 + $0x20] sm:$0xff] %vm1114, %v1086
        %1120 = vst.msk [vmem:[#allocation2 + $0x28] sm:$0xff] %vm1114, %v1087
        %1121 = vst.msk [vmem:[#allocation2 + $0x30] sm:$0xff] %vm1114, %v1088
        %1122 = vst.msk [vmem:[#allocation2 + $0x38] sm:$0xff] %vm1114, %v1089
        %1123 = vst.msk [vmem:[#allocation2 + $0x40] sm:$0xff] %vm1114, %v1090
        %1124 = vst.msk [vmem:[#allocation2 + $0x48] sm:$0xff] %vm1114, %v1091
        %1125 = vst.msk [vmem:[#allocation2 + $0x50] sm:$0xff] %vm1114, %v1092
        %1126 = vst.msk [vmem:[#allocation2 + $0x58] sm:$0xff] %vm1114, %v1093
        %1127 = vst.msk [vmem:[#allocation2 + $0x60] sm:$0xff] %vm1114, %v1094
        %1128 = vst.msk [vmem:[#allocation2 + $0x68] sm:$0xff] %vm1114, %v1095
        %1129 = vst.msk [vmem:[#allocation2 + $0x70] sm:$0xff] %vm1114, %v1096
        %1130 = vst.msk [vmem:[#allocation2 + $0x78] sm:$0xff] %vm1114, %v1097
        %1131 = vst.msk [vmem:[#allocation2 + $0x80] sm:$0xff] %vm1114, %v1098
        %1132 = vst.msk [vmem:[#allocation2 + $0x88] sm:$0xff] %vm1114, %v1099
        %1133 = vst.msk [vmem:[#allocation2 + $0x90] sm:$0xff] %vm1114, %v1100
        %1134 = vst.msk [vmem:[#allocation2 + $0x98] sm:$0xff] %vm1114, %v1101
        %1135 = vst.msk [vmem:[#allocation2 + $0xa0] sm:$0xff] %vm1114, %v1102
        %1136 = vst.msk [vmem:[#allocation2 + $0xa8] sm:$0xff] %vm1114, %v1103
        %1137 = vst.msk [vmem:[#allocation2 + $0xb0] sm:$0xff] %vm1114, %v1104
        %1138 = vst.msk [vmem:[#allocation2 + $0xb8] sm:$0xff] %vm1114, %v1105
        %1139 = vst.msk [vmem:[#allocation2 + $0xc0] sm:$0xff] %vm1114, %v1106
        %1140 = vst.msk [vmem:[#allocation2 + $0xc8] sm:$0xff] %vm1114, %v1107
        %1141 = vst.msk [vmem:[#allocation2 + $0xd0] sm:$0xff] %vm1114, %v1108
        %1142 = vst.msk [vmem:[#allocation2 + $0xd8] sm:$0xff] %vm1114, %v1109
        %1143 = vst.msk [vmem:[#allocation2 + $0xe0] sm:$0xff] %vm1114, %v1110
        %1144 = vst.msk [vmem:[#allocation2 + $0xe8] sm:$0xff] %vm1114, %v1111
        %1145 = vst.msk [vmem:[#allocation2 + $0xf0] sm:$0xff] %vm1114, %v1112
        %1146 = vst.msk [vmem:[#allocation2 + $0xf8] sm:$0xff] %vm1114, %v1113
        // Predicated region
        $region37: #{tpu_custom_call.1} parent=27 // pred_check
          %p1147 = pneg %p234
        $region38: #{tpu_custom_call.1} parent=27 // pred_check_branch
          %1149 = sbr.rel (%p1147) target = $region40
        $region39: #{tpu_custom_call.1} parent=27 // pred_region
          %v1150 = vld [vmem:[#allocation2] sm:$0xff]
          %v1151 = vld [vmem:[#allocation2 + $0x8] sm:$0xff]
          %v1152 = vld [vmem:[#allocation2 + $0x10] sm:$0xff]
          %v1153 = vld [vmem:[#allocation2 + $0x18] sm:$0xff]
          %v1154 = vld [vmem:[#allocation2 + $0x20] sm:$0xff]
          %v1155 = vld [vmem:[#allocation2 + $0x28] sm:$0xff]
          %v1156 = vld [vmem:[#allocation2 + $0x30] sm:$0xff]
          %v1157 = vld [vmem:[#allocation2 + $0x38] sm:$0xff]
          %v1158 = vld [vmem:[#allocation2 + $0x40] sm:$0xff]
          %v1159 = vld [vmem:[#allocation2 + $0x48] sm:$0xff]
          %v1160 = vld [vmem:[#allocation2 + $0x50] sm:$0xff]
          %v1161 = vld [vmem:[#allocation2 + $0x58] sm:$0xff]
          %v1162 = vld [vmem:[#allocation2 + $0x60] sm:$0xff]
          %v1163 = vld [vmem:[#allocation2 + $0x68] sm:$0xff]
          %v1164 = vld [vmem:[#allocation2 + $0x70] sm:$0xff]
          %v1165 = vld [vmem:[#allocation2 + $0x78] sm:$0xff]
          %v1166 = vld [vmem:[#allocation2 + $0x80] sm:$0xff]
          %v1167 = vld [vmem:[#allocation2 + $0x88] sm:$0xff]
          %v1168 = vld [vmem:[#allocation2 + $0x90] sm:$0xff]
          %v1169 = vld [vmem:[#allocation2 + $0x98] sm:$0xff]
          %v1170 = vld [vmem:[#allocation2 + $0xa0] sm:$0xff]
          %v1171 = vld [vmem:[#allocation2 + $0xa8] sm:$0xff]
          %v1172 = vld [vmem:[#allocation2 + $0xb0] sm:$0xff]
          %v1173 = vld [vmem:[#allocation2 + $0xb8] sm:$0xff]
          %v1174 = vld [vmem:[#allocation2 + $0xc0] sm:$0xff]
          %v1175 = vld [vmem:[#allocation2 + $0xc8] sm:$0xff]
          %v1176 = vld [vmem:[#allocation2 + $0xd0] sm:$0xff]
          %v1177 = vld [vmem:[#allocation2 + $0xd8] sm:$0xff]
          %v1178 = vld [vmem:[#allocation2 + $0xe0] sm:$0xff]
          %v1179 = vld [vmem:[#allocation2 + $0xe8] sm:$0xff]
          %v1180 = vld [vmem:[#allocation2 + $0xf0] sm:$0xff]
          %v1181 = vld [vmem:[#allocation2 + $0xf8] sm:$0xff]
          %1182 = vst.msk [vmem:[%s232] sm:$0xff] %vm1114, %v1150
          %1183 = vst.msk [vmem:[%s232 + $0x8] sm:$0xff] %vm1114, %v1151
          %1184 = vst.msk [vmem:[%s232 + $0x10] sm:$0xff] %vm1114, %v1152
          %1185 = vst.msk [vmem:[%s232 + $0x18] sm:$0xff] %vm1114, %v1153
          %1186 = vst.msk [vmem:[%s232 + $0x20] sm:$0xff] %vm1114, %v1154
          %1187 = vst.msk [vmem:[%s232 + $0x28] sm:$0xff] %vm1114, %v1155
          %1188 = vst.msk [vmem:[%s232 + $0x30] sm:$0xff] %vm1114, %v1156
          %1189 = vst.msk [vmem:[%s232 + $0x38] sm:$0xff] %vm1114, %v1157
          %1190 = vst.msk [vmem:[%s232 + $0x40] sm:$0xff] %vm1114, %v1158
          %1191 = vst.msk [vmem:[%s232 + $0x48] sm:$0xff] %vm1114, %v1159
          %1192 = vst.msk [vmem:[%s232 + $0x50] sm:$0xff] %vm1114, %v1160
          %1193 = vst.msk [vmem:[%s232 + $0x58] sm:$0xff] %vm1114, %v1161
          %1194 = vst.msk [vmem:[%s232 + $0x60] sm:$0xff] %vm1114, %v1162
          %1195 = vst.msk [vmem:[%s232 + $0x68] sm:$0xff] %vm1114, %v1163
          %1196 = vst.msk [vmem:[%s232 + $0x70] sm:$0xff] %vm1114, %v1164
          %1197 = vst.msk [vmem:[%s232 + $0x78] sm:$0xff] %vm1114, %v1165
          %1198 = vst.msk [vmem:[%s232 + $0x80] sm:$0xff] %vm1114, %v1166
          %1199 = vst.msk [vmem:[%s232 + $0x88] sm:$0xff] %vm1114, %v1167
          %1200 = vst.msk [vmem:[%s232 + $0x90] sm:$0xff] %vm1114, %v1168
          %1201 = vst.msk [vmem:[%s232 + $0x98] sm:$0xff] %vm1114, %v1169
          %1202 = vst.msk [vmem:[%s232 + $0xa0] sm:$0xff] %vm1114, %v1170
          %1203 = vst.msk [vmem:[%s232 + $0xa8] sm:$0xff] %vm1114, %v1171
          %1204 = vst.msk [vmem:[%s232 + $0xb0] sm:$0xff] %vm1114, %v1172
          %1205 = vst.msk [vmem:[%s232 + $0xb8] sm:$0xff] %vm1114, %v1173
          %1206 = vst.msk [vmem:[%s232 + $0xc0] sm:$0xff] %vm1114, %v1174
          %1207 = vst.msk [vmem:[%s232 + $0xc8] sm:$0xff] %vm1114, %v1175
          %1208 = vst.msk [vmem:[%s232 + $0xd0] sm:$0xff] %vm1114, %v1176
          %1209 = vst.msk [vmem:[%s232 + $0xd8] sm:$0xff] %vm1114, %v1177
          %1210 = vst.msk [vmem:[%s232 + $0xe0] sm:$0xff] %vm1114, %v1178
          %1211 = vst.msk [vmem:[%s232 + $0xe8] sm:$0xff] %vm1114, %v1179
          %1212 = vst.msk [vmem:[%s232 + $0xf0] sm:$0xff] %vm1114, %v1180
          %1213 = vst.msk [vmem:[%s232 + $0xf8] sm:$0xff] %vm1114, %v1181
        $region40: #{tpu_custom_call.1} parent=27 // pred_fallthru
          _
        %s1214 = smul.u32 32, %s21
        %p1215 = scmp.lt.s32.totalorder %s1214, 127
        %s1216 = scalar_select %p1215, %s1214, 127
        %p1217 = scmp.lt.s32.totalorder %s22, 0
        %s1218 = scalar_select %p1217, %s22, 0
        %s1219 = sadd.s32 %s1218, %s1216
        %s1220 = smul.addr %s1219, 8
        %s1221 = scalar_lea.vmem %s2, %s1220
        // Predicated region
        $region41: #{tpu_custom_call.1} parent=27 // pred_check
          %p1222 = pneg %p111
        $region42: #{tpu_custom_call.1} parent=27 // pred_check_branch
          %1224 = sbr.rel (%p1222) target = $region44
        $region43: #{tpu_custom_call.1} parent=27 // pred_region
          %s1225 = smul.u32 32, %s21
        $region44: #{tpu_custom_call.1} parent=27 // pred_fallthru
          _
      $region28: #{tpu_custom_call.1} parent=5 // pred_fallthru
        _
      %p1226 = scmp.le.s32.totalorder 2, %s11
      // Predicated region
      $region45: #{tpu_custom_call.1} parent=5 // pred_check
        %p1227 = pneg %p1226
      $region46: #{tpu_custom_call.1} parent=5 // pred_check_branch
        %1229 = sbr.rel (%p1227) target = $region48
      $region47: #{tpu_custom_call.1} parent=5 // pred_region
        %s1230 = ssub.s32 %s11, 2
        // Predicated region
        $region49: #{tpu_custom_call.1} parent=47 // pred_check
          %p1231 = pneg %p117
        $region50: #{tpu_custom_call.1} parent=47 // pred_check_branch
          %1233 = sbr.rel (%p1231) target = $region52
        $region51: #{tpu_custom_call.1} parent=47 // pred_region
          %s1234 = smul.u32 32, %s24
          %p1235 = scmp.lt.s32.totalorder %s1234, 127
          %s1236 = scalar_select %p1235, %s1234, 127
          %p1237 = scmp.lt.s32.totalorder %s25, 0
          %s1238 = scalar_select %p1237, %s25, 0
          %s1239 = sadd.s32 %s1238, %s1236
          %s1240 = smul.addr %s1239, 8
          %s1241 = scalar_lea.vmem %s2, %s1240
        $region52: #{tpu_custom_call.1} parent=47 // pred_fallthru
          _
      $region48: #{tpu_custom_call.1} parent=5 // pred_fallthru
        _
    $region6: #{tpu_custom_call.1} parent=1 // loop_footer
      %s15 = sadd.s32 1, %s11
    $region7: #{tpu_custom_call.1} parent=1 // loop_footer_branch
      %10 = sbr.rel target = $region3
    $region8: #{tpu_custom_call.1} parent=1 // loop_exit
      _
    %1242 = vsyncpa [#allocation4], 1
    %s1243 = scalar_lea.sflag [#allocation4], 1
    %1244 = vsyncpa %s1243, 1

</llo_original>
